<compile_context>
chip_gen: v7x
topology: tpu7x:2x2x1
jax: 0.10.0
libtpu: 0.0.40
codegen_flags: <defaults>
</compile_context>

<pallas_src>
import functools
import math

import jax
import jax.numpy as jnp
from jax.experimental import pallas as pl
from jax.experimental.pallas import tpu as pltpu

PAD = 128        # lane-dense feature width used for every layer in-kernel
BIAS_ROWS = 8    # each bias gets its own sublane-aligned 8-row block in the slab


def _round_up(n, m):
    return ((n + m - 1) // m) * m


def qnetwork_kernel(x_ref, p_ref, out_ref, *, num_layers):
    """x_ref: (TB, PAD) f32, p_ref: packed param slab, out_ref: (TB, PAD) f32."""
    h = x_ref[...]                                   # already f32, lane-dense
    bias_base = num_layers * PAD
    for l in range(num_layers):                      # statically unrolled (5 layers)
        w = p_ref[l * PAD:(l + 1) * PAD, :]          # (PAD, PAD) weight block
        boff = bias_base + l * BIAS_ROWS
        b = p_ref[boff:boff + 1, :]                  # (1, PAD) bias row (aligned)
        h = jnp.dot(h, w, preferred_element_type=jnp.float32) + b
        if l < num_layers - 1:
            h = jnp.maximum(h, 0.0)
    out_ref[...] = h                                 # full-tile unmasked store


def pack_params(params):
    """Pack [(W [in,out], b [1,out])] into one lane-padded f32 slab.

    Layout (rows): W1..WL each padded to (PAD, PAD), then b1..bL each in an
    8-row block with the bias on row 0. Zero padding keeps the math exact
    (padded lanes stay zero through every layer).
    """
    blocks = []
    for w, _ in params:
        wp = jnp.zeros((PAD, PAD), jnp.float32)
        wp = wp.at[:w.shape[0], :w.shape[1]].set(w.astype(jnp.float32))
        blocks.append(wp)
    for _, b in params:
        bp = jnp.zeros((BIAS_ROWS, PAD), jnp.float32)
        bp = bp.at[0, :b.shape[-1]].set(b.reshape(-1).astype(jnp.float32))
        blocks.append(bp)
    return jnp.concatenate(blocks, axis=0)           # (L*PAD + L*8, PAD)


def qnetwork_forward(x, params, *, tile_b=256):
    """x: [B, input_size] f32; params: list of (W [in,out], b [1,out])."""
    B, in_dim = x.shape
    out_dim = params[-1][0].shape[1]
    num_layers = len(params)

    # Batch tiling: TB rows per grid step (multiple of 8), batch padded to TB.
    TB = min(tile_b, _round_up(B, 8))
    B_pad = _round_up(B, TB)
    grid = (B_pad // TB,)

    # Lane-dense, zero-padded input and packed parameter slab (2 DMAs total).
    x_pad = jnp.zeros((B_pad, PAD), jnp.float32).at[:B, :in_dim].set(
        x.astype(jnp.float32))
    slab = pack_params(params)

    # Advisory cost for XLA scheduling around this custom call.
    flops = 2 * B_pad * num_layers * PAD * PAD
    bytes_accessed = 4 * (x_pad.size + slab.size + B_pad * PAD)
    cost = pl.CostEstimate(flops=flops, transcendentals=0,
                           bytes_accessed=bytes_accessed)

    kernel = functools.partial(qnetwork_kernel, num_layers=num_layers)

    out_pad = pl.pallas_call(
        kernel,
        out_shape=jax.ShapeDtypeStruct((B_pad, PAD), jnp.float32),
        grid=grid,
        in_specs=[
            pl.BlockSpec((TB, PAD), lambda i: (i, 0)),     # batch tile of x
            pl.BlockSpec(slab.shape, lambda i: (0, 0)),    # params: resident slab
        ],
        out_specs=pl.BlockSpec((TB, PAD), lambda i: (i, 0)),
        compiler_params=pltpu.CompilerParams(
            dimension_semantics=("parallel",)),            # v7x: split batch over 2 TCs
        cost_estimate=cost,
    )(x_pad, slab)

    return out_pad[:B, :out_dim]                           # drop padding in wrapper


# ------------------------- parameter init (matches PyTorch) -------------------------

def xavier_uniform(key, fan_in, fan_out):
    # torch.nn.init.xavier_uniform_ (gain=1), produced directly in [in, out] layout.
    bound = math.sqrt(6.0 / (fan_in + fan_out))
    return jax.random.uniform(key, (fan_in, fan_out), jnp.float32, -bound, bound)


def linear_bias(key, fan_in, fan_out):
    # PyTorch nn.Linear default bias init: U(-1/sqrt(fan_in), 1/sqrt(fan_in))
    bound = 1.0 / math.sqrt(fan_in)
    return jax.random.uniform(key, (1, fan_out), jnp.float32, -bound, bound)


def make_params(key, input_size, output_size, hidden_layers_size):
    dims = [input_size] + list(hidden_layers_size) + [output_size]
    params = []
    for i in range(len(dims) - 1):
        key, kw, kb = jax.random.split(key, 3)
        w = xavier_uniform(kw, dims[i], dims[i + 1])
        b = linear_bias(kb, dims[i], dims[i + 1])
        params.append((w, b))
    return params


def reference_forward(x, params):
    h = x
    for i, (w, b) in enumerate(params):
        h = h @ w + b
        if i < len(params) - 1:
            h = jnp.maximum(h, 0.0)
    return h


if __name__ == "__main__":
    key = jax.random.PRNGKey(0)
    key, kx, kp = jax.random.split(key, 3)

    # Tic-tac-toe Q-network: 9-cell board state in, 9 action values out.
    input_size = 9
    output_size = 9
    hidden_layers_size = [32, 32, 32, 32]
    batch = 2

    x = jax.random.normal(kx, (batch, input_size), jnp.float32)
    params = make_params(kp, input_size, output_size, hidden_layers_size)

    y = qnetwork_forward(x, params)
    y = jax.block_until_ready(y)

    y_ref = reference_forward(x, params)
    assert y.shape == (batch, output_size)
    assert jnp.allclose(y, y_ref, atol=1e-5, rtol=1e-5)

    print("KERNEL_OK")
</pallas_src>

<mosaic_0001>
module attributes {stable_mosaic.version = 11 : i64} {
  func.func @qnetwork_kernel(%arg0: i32, %arg1: memref<8x128xf32, #tpu.memory_space<vmem>>, %arg2: memref<680x128xf32, #tpu.memory_space<vmem>>, %arg3: memref<8x128xf32, #tpu.memory_space<vmem>>) attributes {dimension_semantics = [#tpu.dimension_semantics<parallel>], iteration_bounds = array<i64: 1>, scalar_prefetch = 0 : i64, scratch_operands = 0 : i64, tpu.core_type = #tpu.core_type<tc>, window_params = [{transform_indices = @transform_0, window_bounds = array<i64: 8, 128>}, {pipeline_mode = #tpu.pipeline_mode<synchronous>, transform_indices = @transform_1, window_bounds = array<i64: 680, 128>}, {transform_indices = @transform_2, window_bounds = array<i64: 8, 128>}]} {
    %c0 = arith.constant 0 : index
    %c0_0 = arith.constant 0 : index
    %0 = vector.load %arg1[%c0, %c0_0] : memref<8x128xf32, #tpu.memory_space<vmem>>, vector<8x128xf32>
    %c0_1 = arith.constant 0 : index
    %c0_2 = arith.constant 0 : index
    %1 = vector.load %arg2[%c0_1, %c0_2] : memref<680x128xf32, #tpu.memory_space<vmem>>, vector<128x128xf32>
    %c640 = arith.constant 640 : index
    %c0_3 = arith.constant 0 : index
    %2 = vector.load %arg2[%c640, %c0_3] : memref<680x128xf32, #tpu.memory_space<vmem>>, vector<1x128xf32>
    %cst = arith.constant dense<0.000000e+00> : vector<8x128xf32>
    %3 = tpu.matmul %0, %1, %cst {dimension_numbers = #tpu.dot_dimension_numbers<[1], [0], [0], [1], [0, 0, 1, 1], [], []>} : vector<8x128xf32>, vector<128x128xf32>, vector<8x128xf32> -> vector<8x128xf32>
    %4 = vector.broadcast %2 : vector<1x128xf32> to vector<8x128xf32>
    %5 = arith.addf %3, %4 : vector<8x128xf32>
    %cst_4 = arith.constant 0.000000e+00 : f32
    %6 = vector.broadcast %cst_4 : f32 to vector<8x128xf32>
    %7 = arith.maximumf %5, %6 : vector<8x128xf32>
    %c128 = arith.constant 128 : index
    %c0_5 = arith.constant 0 : index
    %8 = vector.load %arg2[%c128, %c0_5] : memref<680x128xf32, #tpu.memory_space<vmem>>, vector<128x128xf32>
    %c648 = arith.constant 648 : index
    %c0_6 = arith.constant 0 : index
    %9 = vector.load %arg2[%c648, %c0_6] : memref<680x128xf32, #tpu.memory_space<vmem>>, vector<1x128xf32>
    %cst_7 = arith.constant dense<0.000000e+00> : vector<8x128xf32>
    %10 = tpu.matmul %7, %8, %cst_7 {dimension_numbers = #tpu.dot_dimension_numbers<[1], [0], [0], [1], [0, 0, 1, 1], [], []>} : vector<8x128xf32>, vector<128x128xf32>, vector<8x128xf32> -> vector<8x128xf32>
    %11 = vector.broadcast %9 : vector<1x128xf32> to vector<8x128xf32>
    %12 = arith.addf %10, %11 : vector<8x128xf32>
    %cst_8 = arith.constant 0.000000e+00 : f32
    %13 = vector.broadcast %cst_8 : f32 to vector<8x128xf32>
    %14 = arith.maximumf %12, %13 : vector<8x128xf32>
    %c256 = arith.constant 256 : index
    %c0_9 = arith.constant 0 : index
    %15 = vector.load %arg2[%c256, %c0_9] : memref<680x128xf32, #tpu.memory_space<vmem>>, vector<128x128xf32>
    %c656 = arith.constant 656 : index
    %c0_10 = arith.constant 0 : index
    %16 = vector.load %arg2[%c656, %c0_10] : memref<680x128xf32, #tpu.memory_space<vmem>>, vector<1x128xf32>
    %cst_11 = arith.constant dense<0.000000e+00> : vector<8x128xf32>
    %17 = tpu.matmul %14, %15, %cst_11 {dimension_numbers = #tpu.dot_dimension_numbers<[1], [0], [0], [1], [0, 0, 1, 1], [], []>} : vector<8x128xf32>, vector<128x128xf32>, vector<8x128xf32> -> vector<8x128xf32>
    %18 = vector.broadcast %16 : vector<1x128xf32> to vector<8x128xf32>
    %19 = arith.addf %17, %18 : vector<8x128xf32>
    %cst_12 = arith.constant 0.000000e+00 : f32
    %20 = vector.broadcast %cst_12 : f32 to vector<8x128xf32>
    %21 = arith.maximumf %19, %20 : vector<8x128xf32>
    %c384 = arith.constant 384 : index
    %c0_13 = arith.constant 0 : index
    %22 = vector.load %arg2[%c384, %c0_13] : memref<680x128xf32, #tpu.memory_space<vmem>>, vector<128x128xf32>
    %c664 = arith.constant 664 : index
    %c0_14 = arith.constant 0 : index
    %23 = vector.load %arg2[%c664, %c0_14] : memref<680x128xf32, #tpu.memory_space<vmem>>, vector<1x128xf32>
    %cst_15 = arith.constant dense<0.000000e+00> : vector<8x128xf32>
    %24 = tpu.matmul %21, %22, %cst_15 {dimension_numbers = #tpu.dot_dimension_numbers<[1], [0], [0], [1], [0, 0, 1, 1], [], []>} : vector<8x128xf32>, vector<128x128xf32>, vector<8x128xf32> -> vector<8x128xf32>
    %25 = vector.broadcast %23 : vector<1x128xf32> to vector<8x128xf32>
    %26 = arith.addf %24, %25 : vector<8x128xf32>
    %cst_16 = arith.constant 0.000000e+00 : f32
    %27 = vector.broadcast %cst_16 : f32 to vector<8x128xf32>
    %28 = arith.maximumf %26, %27 : vector<8x128xf32>
    %c512 = arith.constant 512 : index
    %c0_17 = arith.constant 0 : index
    %29 = vector.load %arg2[%c512, %c0_17] : memref<680x128xf32, #tpu.memory_space<vmem>>, vector<128x128xf32>
    %c672 = arith.constant 672 : index
    %c0_18 = arith.constant 0 : index
    %30 = vector.load %arg2[%c672, %c0_18] : memref<680x128xf32, #tpu.memory_space<vmem>>, vector<1x128xf32>
    %cst_19 = arith.constant dense<0.000000e+00> : vector<8x128xf32>
    %31 = tpu.matmul %28, %29, %cst_19 {dimension_numbers = #tpu.dot_dimension_numbers<[1], [0], [0], [1], [0, 0, 1, 1], [], []>} : vector<8x128xf32>, vector<128x128xf32>, vector<8x128xf32> -> vector<8x128xf32>
    %32 = vector.broadcast %30 : vector<1x128xf32> to vector<8x128xf32>
    %33 = arith.addf %31, %32 : vector<8x128xf32>
    %c0_20 = arith.constant 0 : index
    %c0_21 = arith.constant 0 : index
    %34 = vector.load %arg3[%c0_20, %c0_21] : memref<8x128xf32, #tpu.memory_space<vmem>>, vector<8x128xf32>
    tpu.vector_store %arg3[%c0_20, %c0_21], %33 {strides = array<i32>} : memref<8x128xf32, #tpu.memory_space<vmem>>, vector<8x128xf32>,
    return
  }
  func.func @transform_0(%arg0: i32) -> (i32, i32) {
    %c0_i32 = arith.constant 0 : i32
    %c0_i32_0 = arith.constant 0 : i32
    return %arg0, %c0_i32 : i32, i32
  }
  func.func @transform_1(%arg0: i32) -> (i32, i32) {
    %c0_i32 = arith.constant 0 : i32
    %c0_i32_0 = arith.constant 0 : i32
    %c0_i32_1 = arith.constant 0 : i32
    return %c0_i32, %c0_i32_0 : i32, i32
  }
  func.func @transform_2(%arg0: i32) -> (i32, i32) {
    %c0_i32 = arith.constant 0 : i32
    %c0_i32_0 = arith.constant 0 : i32
    return %arg0, %c0_i32 : i32, i32
  }
}

</mosaic_0001>

<llo_original>
// kernel: tpu_custom_call.1
$region0: #{tpu_custom_call.1}
  #allocation0 [shape = 'u32[]', space=smem, size = 0x4, offset = 0x4, fixed_abs, tag = 'smem constant byte address 0x4 - core index']
  #allocation1 [shape = 'u32[144,128]{1,0:T(1,128)}', space=vmem, size = 0x12000, scoped, tag = 'internal scratch']
  %s0 = inlined_call_operand.hbm [shape: f32[8,128], index: 0, kind: input, shape index: {}]
  %s1 = inlined_call_operand.hbm [shape: f32[680,128], index: 1, kind: input, shape index: {}]
  %s2 = inlined_call_operand.hbm [shape: f32[8,128], index: 2, kind: output, shape index: {}]
  %s3 = sld [smem:[#allocation0]]
  $region26: #{tpu_custom_call.1} parent=0
    _
  %s5 = ssub.s32 1, %s3
  %s6 = scalar_select 0, %s5, %s3
  $region1: #{tpu_custom_call.1} parent=0
    #allocation2 [shape = 'u8[4096]{0}', space=vmem, size = 0x1000, scoped, tag = 'input window, operand 0, single buffered']
    #allocation3 [shape = 's32[1]{0}', space=sflag, size = 0x4, scoped, tag = 'scoped memory for tpu_custom_call.1']
    #allocation4 [shape = 's32[1]{0}', space=sflag, size = 0x4, scoped, tag = 'scoped memory for tpu_custom_call.1']
    #allocation5 [shape = 'u8[348160]{0}', space=vmem, size = 0x55000, scoped, tag = 'input window, operand 1, single buffered']
    #allocation6 [shape = 's32[1]{0}', space=sflag, size = 0x4, scoped, tag = 'scoped memory for tpu_custom_call.1']
    #allocation7 [shape = 'u8[4096]{0}', space=vmem, size = 0x1000, scoped, tag = 'output window, operand 0, single buffered']
    %7 = vsyncpa [#allocation3], 0
    %8 = vsyncpa [#allocation6], 0
    %9 = vsyncpa [#allocation4], 0
    // Predicated region
    $region2: #{tpu_custom_call.1} parent=1 // pred_check
      _
    $region3: #{tpu_custom_call.1} parent=1 // pred_check_branch
      %11 = sbr.rel (0) target = $region5
    $region4: #{tpu_custom_call.1} parent=1 // pred_region
      %s13 = ssub.s32 128, 128
      %14 = vsyncadd [#allocation3], %s13
      %s16 = sshll.u32 [#allocation2], 4
      %s17 = int_to_ptr.vmem [resolvable:$true] %s16
      %19 = dma.hbm_to_vmem [thread:$0]  %s0, 128, %s17, [#allocation3]
    $region5: #{tpu_custom_call.1} parent=1 // pred_fallthru
      _
    // Predicated region
    $region6: #{tpu_custom_call.1} parent=1 // pred_check
      _
    $region7: #{tpu_custom_call.1} parent=1 // pred_check_branch
      %21 = sbr.rel (0) target = $region9
    $region8: #{tpu_custom_call.1} parent=1 // pred_region
      %s23 = ssub.s32 10880, 10880
      %24 = vsyncadd [#allocation6], %s23
      %s25 = sshll.u32 [#allocation5], 4
      %s26 = int_to_ptr.vmem [resolvable:$true] %s25
      %31 = dma.hbm_to_vmem [thread:$0]  %s1, 10880, %s26, [#allocation6], 128, 128, 8
    $region9: #{tpu_custom_call.1} parent=1 // pred_fallthru
      _
    // Predicated region
    $region10: #{tpu_custom_call.1} parent=1 // pred_check
      _
    $region11: #{tpu_custom_call.1} parent=1 // pred_check_branch
      %33 = sbr.rel (0) target = $region13
    $region12: #{tpu_custom_call.1} parent=1 // pred_region
      %34 = dma.done [#allocation3], 128
    $region13: #{tpu_custom_call.1} parent=1 // pred_fallthru
      _
    // Predicated region
    $region14: #{tpu_custom_call.1} parent=1 // pred_check
      _
    $region15: #{tpu_custom_call.1} parent=1 // pred_check_branch
      %36 = sbr.rel (0) target = $region17
    $region16: #{tpu_custom_call.1} parent=1 // pred_region
      %37 = dma.done [#allocation6], 10880
    $region17: #{tpu_custom_call.1} parent=1 // pred_fallthru
      _
    %v38 = vld [vmem:[#allocation2] sm:$0xff]
    %v39 = vld [vmem:[#allocation5] sm:$0xff]
    %v40 = vld [vmem:[#allocation5 + $0x8] sm:$0xff]
    %v41 = vld [vmem:[#allocation5 + $0x10] sm:$0xff]
    %v42 = vld [vmem:[#allocation5 + $0x18] sm:$0xff]
    %v43 = vld [vmem:[#allocation5 + $0x20] sm:$0xff]
    %v44 = vld [vmem:[#allocation5 + $0x28] sm:$0xff]
    %v45 = vld [vmem:[#allocation5 + $0x30] sm:$0xff]
    %v46 = vld [vmem:[#allocation5 + $0x38] sm:$0xff]
    %v47 = vld [vmem:[#allocation5 + $0x40] sm:$0xff]
    %v48 = vld [vmem:[#allocation5 + $0x48] sm:$0xff]
    %v49 = vld [vmem:[#allocation5 + $0x50] sm:$0xff]
    %v50 = vld [vmem:[#allocation5 + $0x58] sm:$0xff]
    %v51 = vld [vmem:[#allocation5 + $0x60] sm:$0xff]
    %v52 = vld [vmem:[#allocation5 + $0x68] sm:$0xff]
    %v53 = vld [vmem:[#allocation5 + $0x70] sm:$0xff]
    %v54 = vld [vmem:[#allocation5 + $0x78] sm:$0xff]
    %v55 = vld [vmem:[#allocation5 + $0x280] sm:$0x1]
    %v56 = vlaneseq
    %v57 = vshrl.u32 %v56, 7
    %v58 = vsub.s32 0, %v57
    %v59 = vrot.slane %v55, %v58
    %60 = vmatprep.subr.mxu0 0.0
    %61 = vmatpush1.msra.mxu0 %v39
    %62 = vmatprep.subr.mxu0 0.0
    %63 = vmatpush1.msra.mxu0 %v40
    %64 = vmatprep.subr.mxu0 0.0
    %65 = vmatpush1.msra.mxu0 %v41
    %66 = vmatprep.subr.mxu0 0.0
    %67 = vmatpush1.msra.mxu0 %v42
    %68 = vmatprep.subr.mxu0 0.0
    %69 = vmatpush1.msra.mxu0 %v43
    %70 = vmatprep.subr.mxu0 0.0
    %71 = vmatpush1.msra.mxu0 %v44
    %72 = vmatprep.subr.mxu0 0.0
    %73 = vmatpush1.msra.mxu0 %v45
    %74 = vmatprep.subr.mxu0 0.0
    %75 = vmatpush1.msra.mxu0 %v46
    %76 = vmatprep.subr.mxu0 0.0
    %77 = vmatpush1.msra.mxu0 %v47
    %78 = vmatprep.subr.mxu0 0.0
    %79 = vmatpush1.msra.mxu0 %v48
    %80 = vmatprep.subr.mxu0 0.0
    %81 = vmatpush1.msra.mxu0 %v49
    %82 = vmatprep.subr.mxu0 0.0
    %83 = vmatpush1.msra.mxu0 %v50
    %84 = vmatprep.subr.mxu0 0.0
    %85 = vmatpush1.msra.mxu0 %v51
    %86 = vmatprep.subr.mxu0 0.0
    %87 = vmatpush1.msra.mxu0 %v52
    %88 = vmatprep.subr.mxu0 0.0
    %89 = vmatpush1.msra.mxu0 %v53
    %90 = vmatprep.subr.mxu0 0.0
    %91 = vmatpush1.msra.mxu0 %v54
    %92 = vmatprep.subr.mxu0 0.0
    %93 = vmatpush1.msra.mxu0 0.0
    %94 = vmatprep.subr.mxu0 0.0
    %95 = vmatpush1.msra.mxu0 0.0
    %96 = vmatprep.subr.mxu0 0.0
    %97 = vmatpush1.msra.mxu0 0.0
    %98 = vmatprep.subr.mxu0 0.0
    %99 = vmatpush1.msra.mxu0 0.0
    %100 = vmatprep.subr.mxu0 0.0
    %101 = vmatpush1.msra.mxu0 0.0
    %102 = vmatprep.subr.mxu0 0.0
    %103 = vmatpush1.msra.mxu0 0.0
    %104 = vmatprep.subr.mxu0 0.0
    %105 = vmatpush1.msra.mxu0 0.0
    %106 = vmatprep.subr.mxu0 0.0
    %107 = vmatpush1.msra.mxu0 0.0
    %108 = vmatprep.subr.mxu0 0.0
    %109 = vmatpush1.msra.mxu0 0.0
    %110 = vmatprep.subr.mxu0 0.0
    %111 = vmatpush1.msra.mxu0 0.0
    %112 = vmatprep.subr.mxu0 0.0
    %113 = vmatpush1.msra.mxu0 0.0
    %114 = vmatprep.subr.mxu0 0.0
    %115 = vmatpush1.msra.mxu0 0.0
    %116 = vmatprep.subr.mxu0 0.0
    %117 = vmatpush1.msra.mxu0 0.0
    %118 = vmatprep.subr.mxu0 0.0
    %119 = vmatpush1.msra.mxu0 0.0
    %120 = vmatprep.subr.mxu0 0.0
    %121 = vmatpush1.msra.mxu0 0.0
    %122 = vmatprep.subr.mxu0 0.0
    %123 = vmatpush1.msra.mxu0 0.0
    %124 = vmatprep.mubr.f32.mxu0 0.0
    %125 = vmatmul.mubr.f32.gmra.mrb[0].mxu0 %v38
    %v126 = vpop.f32.mrb[0].mxu0
    %v127 = vadd.f32 %v59, %v126
    %v128 = vpop.f32.mrb[0].mxu0
    %129 = vdwg.mxu0
    %v130 = vmax.f32 %v127, 0.0
    %v131 = vld [vmem:[#allocation5 + $0x80] sm:$0xff]
    %v132 = vld [vmem:[#allocation5 + $0x88] sm:$0xff]
    %v133 = vld [vmem:[#allocation5 + $0x90] sm:$0xff]
    %v134 = vld [vmem:[#allocation5 + $0x98] sm:$0xff]
    %v135 = vld [vmem:[#allocation5 + $0xa0] sm:$0xff]
    %v136 = vld [vmem:[#allocation5 + $0xa8] sm:$0xff]
    %v137 = vld [vmem:[#allocation5 + $0xb0] sm:$0xff]
    %v138 = vld [vmem:[#allocation5 + $0xb8] sm:$0xff]
    %v139 = vld [vmem:[#allocation5 + $0xc0] sm:$0xff]
    %v140 = vld [vmem:[#allocation5 + $0xc8] sm:$0xff]
    %v141 = vld [vmem:[#allocation5 + $0xd0] sm:$0xff]
    %v142 = vld [vmem:[#allocation5 + $0xd8] sm:$0xff]
    %v143 = vld [vmem:[#allocation5 + $0xe0] sm:$0xff]
    %v144 = vld [vmem:[#allocation5 + $0xe8] sm:$0xff]
    %v145 = vld [vmem:[#allocation5 + $0xf0] sm:$0xff]
    %v146 = vld [vmem:[#allocation5 + $0xf8] sm:$0xff]
    %v147 = vld [vmem:[#allocation5 + $0x288] sm:$0x1]
    %v148 = vlaneseq
    %v149 = vshrl.u32 %v148, 7
    %v150 = vsub.s32 0, %v149
    %v151 = vrot.slane %v147, %v150
    %152 = vmatprep.subr.mxu0 0.0
    %153 = vmatpush1.msra.mxu0 %v131
    %154 = vmatprep.subr.mxu0 0.0
    %155 = vmatpush1.msra.mxu0 %v132
    %156 = vmatprep.subr.mxu0 0.0
    %157 = vmatpush1.msra.mxu0 %v133
    %158 = vmatprep.subr.mxu0 0.0
    %159 = vmatpush1.msra.mxu0 %v134
    %160 = vmatprep.subr.mxu0 0.0
    %161 = vmatpush1.msra.mxu0 %v135
    %162 = vmatprep.subr.mxu0 0.0
    %163 = vmatpush1.msra.mxu0 %v136
    %164 = vmatprep.subr.mxu0 0.0
    %165 = vmatpush1.msra.mxu0 %v137
    %166 = vmatprep.subr.mxu0 0.0
    %167 = vmatpush1.msra.mxu0 %v138
    %168 = vmatprep.subr.mxu0 0.0
    %169 = vmatpush1.msra.mxu0 %v139
    %170 = vmatprep.subr.mxu0 0.0
    %171 = vmatpush1.msra.mxu0 %v140
    %172 = vmatprep.subr.mxu0 0.0
    %173 = vmatpush1.msra.mxu0 %v141
    %174 = vmatprep.subr.mxu0 0.0
    %175 = vmatpush1.msra.mxu0 %v142
    %176 = vmatprep.subr.mxu0 0.0
    %177 = vmatpush1.msra.mxu0 %v143
    %178 = vmatprep.subr.mxu0 0.0
    %179 = vmatpush1.msra.mxu0 %v144
    %180 = vmatprep.subr.mxu0 0.0
    %181 = vmatpush1.msra.mxu0 %v145
    %182 = vmatprep.subr.mxu0 0.0
    %183 = vmatpush1.msra.mxu0 %v146
    %184 = vmatprep.subr.mxu0 0.0
    %185 = vmatpush1.msra.mxu0 0.0
    %186 = vmatprep.subr.mxu0 0.0
    %187 = vmatpush1.msra.mxu0 0.0
    %188 = vmatprep.subr.mxu0 0.0
    %189 = vmatpush1.msra.mxu0 0.0
    %190 = vmatprep.subr.mxu0 0.0
    %191 = vmatpush1.msra.mxu0 0.0
    %192 = vmatprep.subr.mxu0 0.0
    %193 = vmatpush1.msra.mxu0 0.0
    %194 = vmatprep.subr.mxu0 0.0
    %195 = vmatpush1.msra.mxu0 0.0
    %196 = vmatprep.subr.mxu0 0.0
    %197 = vmatpush1.msra.mxu0 0.0
    %198 = vmatprep.subr.mxu0 0.0
    %199 = vmatpush1.msra.mxu0 0.0
    %200 = vmatprep.subr.mxu0 0.0
    %201 = vmatpush1.msra.mxu0 0.0
    %202 = vmatprep.subr.mxu0 0.0
    %203 = vmatpush1.msra.mxu0 0.0
    %204 = vmatprep.subr.mxu0 0.0
    %205 = vmatpush1.msra.mxu0 0.0
    %206 = vmatprep.subr.mxu0 0.0
    %207 = vmatpush1.msra.mxu0 0.0
    %208 = vmatprep.subr.mxu0 0.0
    %209 = vmatpush1.msra.mxu0 0.0
    %210 = vmatprep.subr.mxu0 0.0
    %211 = vmatpush1.msra.mxu0 0.0
    %212 = vmatprep.subr.mxu0 0.0
    %213 = vmatpush1.msra.mxu0 0.0
    %214 = vmatprep.subr.mxu0 0.0
    %215 = vmatpush1.msra.mxu0 0.0
    %216 = vmatprep.mubr.f32.mxu0 0.0
    %217 = vmatmul.mubr.f32.gmra.mrb[0].mxu0 %v130
    %v218 = vpop.f32.mrb[0].mxu0
    %v219 = vadd.f32 %v151, %v218
    %v220 = vpop.f32.mrb[0].mxu0
    %221 = vdwg.mxu0
    %v222 = vmax.f32 %v219, 0.0
    %v223 = vld [vmem:[#allocation5 + $0x100] sm:$0xff]
    %v224 = vld [vmem:[#allocation5 + $0x108] sm:$0xff]
    %v225 = vld [vmem:[#allocation5 + $0x110] sm:$0xff]
    %v226 = vld [vmem:[#allocation5 + $0x118] sm:$0xff]
    %v227 = vld [vmem:[#allocation5 + $0x120] sm:$0xff]
    %v228 = vld [vmem:[#allocation5 + $0x128] sm:$0xff]
    %v229 = vld [vmem:[#allocation5 + $0x130] sm:$0xff]
    %v230 = vld [vmem:[#allocation5 + $0x138] sm:$0xff]
    %v231 = vld [vmem:[#allocation5 + $0x140] sm:$0xff]
    %v232 = vld [vmem:[#allocation5 + $0x148] sm:$0xff]
    %v233 = vld [vmem:[#allocation5 + $0x150] sm:$0xff]
    %v234 = vld [vmem:[#allocation5 + $0x158] sm:$0xff]
    %v235 = vld [vmem:[#allocation5 + $0x160] sm:$0xff]
    %v236 = vld [vmem:[#allocation5 + $0x168] sm:$0xff]
    %v237 = vld [vmem:[#allocation5 + $0x170] sm:$0xff]
    %v238 = vld [vmem:[#allocation5 + $0x178] sm:$0xff]
    %v239 = vld [vmem:[#allocation5 + $0x290] sm:$0x1]
    %v240 = vlaneseq
    %v241 = vshrl.u32 %v240, 7
    %v242 = vsub.s32 0, %v241
    %v243 = vrot.slane %v239, %v242
    %244 = vmatprep.subr.mxu0 0.0
    %245 = vmatpush1.msra.mxu0 %v223
    %246 = vmatprep.subr.mxu0 0.0
    %247 = vmatpush1.msra.mxu0 %v224
    %248 = vmatprep.subr.mxu0 0.0
    %249 = vmatpush1.msra.mxu0 %v225
    %250 = vmatprep.subr.mxu0 0.0
    %251 = vmatpush1.msra.mxu0 %v226
    %252 = vmatprep.subr.mxu0 0.0
    %253 = vmatpush1.msra.mxu0 %v227
    %254 = vmatprep.subr.mxu0 0.0
    %255 = vmatpush1.msra.mxu0 %v228
    %256 = vmatprep.subr.mxu0 0.0
    %257 = vmatpush1.msra.mxu0 %v229
    %258 = vmatprep.subr.mxu0 0.0
    %259 = vmatpush1.msra.mxu0 %v230
    %260 = vmatprep.subr.mxu0 0.0
    %261 = vmatpush1.msra.mxu0 %v231
    %262 = vmatprep.subr.mxu0 0.0
    %263 = vmatpush1.msra.mxu0 %v232
    %264 = vmatprep.subr.mxu0 0.0
    %265 = vmatpush1.msra.mxu0 %v233
    %266 = vmatprep.subr.mxu0 0.0
    %267 = vmatpush1.msra.mxu0 %v234
    %268 = vmatprep.subr.mxu0 0.0
    %269 = vmatpush1.msra.mxu0 %v235
    %270 = vmatprep.subr.mxu0 0.0
    %271 = vmatpush1.msra.mxu0 %v236
    %272 = vmatprep.subr.mxu0 0.0
    %273 = vmatpush1.msra.mxu0 %v237
    %274 = vmatprep.subr.mxu0 0.0
    %275 = vmatpush1.msra.mxu0 %v238
    %276 = vmatprep.subr.mxu0 0.0
    %277 = vmatpush1.msra.mxu0 0.0
    %278 = vmatprep.subr.mxu0 0.0
    %279 = vmatpush1.msra.mxu0 0.0
    %280 = vmatprep.subr.mxu0 0.0
    %281 = vmatpush1.msra.mxu0 0.0
    %282 = vmatprep.subr.mxu0 0.0
    %283 = vmatpush1.msra.mxu0 0.0
    %284 = vmatprep.subr.mxu0 0.0
    %285 = vmatpush1.msra.mxu0 0.0
    %286 = vmatprep.subr.mxu0 0.0
    %287 = vmatpush1.msra.mxu0 0.0
    %288 = vmatprep.subr.mxu0 0.0
    %289 = vmatpush1.msra.mxu0 0.0
    %290 = vmatprep.subr.mxu0 0.0
    %291 = vmatpush1.msra.mxu0 0.0
    %292 = vmatprep.subr.mxu0 0.0
    %293 = vmatpush1.msra.mxu0 0.0
    %294 = vmatprep.subr.mxu0 0.0
    %295 = vmatpush1.msra.mxu0 0.0
    %296 = vmatprep.subr.mxu0 0.0
    %297 = vmatpush1.msra.mxu0 0.0
    %298 = vmatprep.subr.mxu0 0.0
    %299 = vmatpush1.msra.mxu0 0.0
    %300 = vmatprep.subr.mxu0 0.0
    %301 = vmatpush1.msra.mxu0 0.0
    %302 = vmatprep.subr.mxu0 0.0
    %303 = vmatpush1.msra.mxu0 0.0
    %304 = vmatprep.subr.mxu0 0.0
    %305 = vmatpush1.msra.mxu0 0.0
    %306 = vmatprep.subr.mxu0 0.0
    %307 = vmatpush1.msra.mxu0 0.0
    %308 = vmatprep.mubr.f32.mxu0 0.0
    %309 = vmatmul.mubr.f32.gmra.mrb[0].mxu0 %v222
    %v310 = vpop.f32.mrb[0].mxu0
    %v311 = vadd.f32 %v243, %v310
    %v312 = vpop.f32.mrb[0].mxu0
    %313 = vdwg.mxu0
    %v314 = vmax.f32 %v311, 0.0
    %v315 = vld [vmem:[#allocation5 + $0x180] sm:$0xff]
    %v316 = vld [vmem:[#allocation5 + $0x188] sm:$0xff]
    %v317 = vld [vmem:[#allocation5 + $0x190] sm:$0xff]
    %v318 = vld [vmem:[#allocation5 + $0x198] sm:$0xff]
    %v319 = vld [vmem:[#allocation5 + $0x1a0] sm:$0xff]
    %v320 = vld [vmem:[#allocation5 + $0x1a8] sm:$0xff]
    %v321 = vld [vmem:[#allocation5 + $0x1b0] sm:$0xff]
    %v322 = vld [vmem:[#allocation5 + $0x1b8] sm:$0xff]
    %v323 = vld [vmem:[#allocation5 + $0x1c0] sm:$0xff]
    %v324 = vld [vmem:[#allocation5 + $0x1c8] sm:$0xff]
    %v325 = vld [vmem:[#allocation5 + $0x1d0] sm:$0xff]
    %v326 = vld [vmem:[#allocation5 + $0x1d8] sm:$0xff]
    %v327 = vld [vmem:[#allocation5 + $0x1e0] sm:$0xff]
    %v328 = vld [vmem:[#allocation5 + $0x1e8] sm:$0xff]
    %v329 = vld [vmem:[#allocation5 + $0x1f0] sm:$0xff]
    %v330 = vld [vmem:[#allocation5 + $0x1f8] sm:$0xff]
    %v331 = vld [vmem:[#allocation5 + $0x298] sm:$0x1]
    %v332 = vlaneseq
    %v333 = vshrl.u32 %v332, 7
    %v334 = vsub.s32 0, %v333
    %v335 = vrot.slane %v331, %v334
    %336 = vmatprep.subr.mxu0 0.0
    %337 = vmatpush1.msra.mxu0 %v315
    %338 = vmatprep.subr.mxu0 0.0
    %339 = vmatpush1.msra.mxu0 %v316
    %340 = vmatprep.subr.mxu0 0.0
    %341 = vmatpush1.msra.mxu0 %v317
    %342 = vmatprep.subr.mxu0 0.0
    %343 = vmatpush1.msra.mxu0 %v318
    %344 = vmatprep.subr.mxu0 0.0
    %345 = vmatpush1.msra.mxu0 %v319
    %346 = vmatprep.subr.mxu0 0.0
    %347 = vmatpush1.msra.mxu0 %v320
    %348 = vmatprep.subr.mxu0 0.0
    %349 = vmatpush1.msra.mxu0 %v321
    %350 = vmatprep.subr.mxu0 0.0
    %351 = vmatpush1.msra.mxu0 %v322
    %352 = vmatprep.subr.mxu0 0.0
    %353 = vmatpush1.msra.mxu0 %v323
    %354 = vmatprep.subr.mxu0 0.0
    %355 = vmatpush1.msra.mxu0 %v324
    %356 = vmatprep.subr.mxu0 0.0
    %357 = vmatpush1.msra.mxu0 %v325
    %358 = vmatprep.subr.mxu0 0.0
    %359 = vmatpush1.msra.mxu0 %v326
    %360 = vmatprep.subr.mxu0 0.0
    %361 = vmatpush1.msra.mxu0 %v327
    %362 = vmatprep.subr.mxu0 0.0
    %363 = vmatpush1.msra.mxu0 %v328
    %364 = vmatprep.subr.mxu0 0.0
    %365 = vmatpush1.msra.mxu0 %v329
    %366 = vmatprep.subr.mxu0 0.0
    %367 = vmatpush1.msra.mxu0 %v330
    %368 = vmatprep.subr.mxu0 0.0
    %369 = vmatpush1.msra.mxu0 0.0
    %370 = vmatprep.subr.mxu0 0.0
    %371 = vmatpush1.msra.mxu0 0.0
    %372 = vmatprep.subr.mxu0 0.0
    %373 = vmatpush1.msra.mxu0 0.0
    %374 = vmatprep.subr.mxu0 0.0
    %375 = vmatpush1.msra.mxu0 0.0
    %376 = vmatprep.subr.mxu0 0.0
    %377 = vmatpush1.msra.mxu0 0.0
    %378 = vmatprep.subr.mxu0 0.0
    %379 = vmatpush1.msra.mxu0 0.0
    %380 = vmatprep.subr.mxu0 0.0
    %381 = vmatpush1.msra.mxu0 0.0
    %382 = vmatprep.subr.mxu0 0.0
    %383 = vmatpush1.msra.mxu0 0.0
    %384 = vmatprep.subr.mxu0 0.0
    %385 = vmatpush1.msra.mxu0 0.0
    %386 = vmatprep.subr.mxu0 0.0
    %387 = vmatpush1.msra.mxu0 0.0
    %388 = vmatprep.subr.mxu0 0.0
    %389 = vmatpush1.msra.mxu0 0.0
    %390 = vmatprep.subr.mxu0 0.0
    %391 = vmatpush1.msra.mxu0 0.0
    %392 = vmatprep.subr.mxu0 0.0
    %393 = vmatpush1.msra.mxu0 0.0
    %394 = vmatprep.subr.mxu0 0.0
    %395 = vmatpush1.msra.mxu0 0.0
    %396 = vmatprep.subr.mxu0 0.0
    %397 = vmatpush1.msra.mxu0 0.0
    %398 = vmatprep.subr.mxu0 0.0
    %399 = vmatpush1.msra.mxu0 0.0
    %400 = vmatprep.mubr.f32.mxu0 0.0
    %401 = vmatmul.mubr.f32.gmra.mrb[0].mxu0 %v314
    %v402 = vpop.f32.mrb[0].mxu0
    %v403 = vadd.f32 %v335, %v402
    %v404 = vpop.f32.mrb[0].mxu0
    %405 = vdwg.mxu0
    %v406 = vmax.f32 %v403, 0.0
    %v407 = vld [vmem:[#allocation5 + $0x200] sm:$0xff]
    %v408 = vld [vmem:[#allocation5 + $0x208] sm:$0xff]
    %v409 = vld [vmem:[#allocation5 + $0x210] sm:$0xff]
    %v410 = vld [vmem:[#allocation5 + $0x218] sm:$0xff]
    %v411 = vld [vmem:[#allocation5 + $0x220] sm:$0xff]
    %v412 = vld [vmem:[#allocation5 + $0x228] sm:$0xff]
    %v413 = vld [vmem:[#allocation5 + $0x230] sm:$0xff]
    %v414 = vld [vmem:[#allocation5 + $0x238] sm:$0xff]
    %v415 = vld [vmem:[#allocation5 + $0x240] sm:$0xff]
    %v416 = vld [vmem:[#allocation5 + $0x248] sm:$0xff]
    %v417 = vld [vmem:[#allocation5 + $0x250] sm:$0xff]
    %v418 = vld [vmem:[#allocation5 + $0x258] sm:$0xff]
    %v419 = vld [vmem:[#allocation5 + $0x260] sm:$0xff]
    %v420 = vld [vmem:[#allocation5 + $0x268] sm:$0xff]
    %v421 = vld [vmem:[#allocation5 + $0x270] sm:$0xff]
    %v422 = vld [vmem:[#allocation5 + $0x278] sm:$0xff]
    %v423 = vld [vmem:[#allocation5 + $0x2a0] sm:$0x1]
    %v424 = vlaneseq
    %v425 = vshrl.u32 %v424, 7
    %v426 = vsub.s32 0, %v425
    %v427 = vrot.slane %v423, %v426
    %428 = vmatprep.subr.mxu0 0.0
    %429 = vmatpush1.msra.mxu0 %v407
    %430 = vmatprep.subr.mxu0 0.0
    %431 = vmatpush1.msra.mxu0 %v408
    %432 = vmatprep.subr.mxu0 0.0
    %433 = vmatpush1.msra.mxu0 %v409
    %434 = vmatprep.subr.mxu0 0.0
    %435 = vmatpush1.msra.mxu0 %v410
    %436 = vmatprep.subr.mxu0 0.0
    %437 = vmatpush1.msra.mxu0 %v411
    %438 = vmatprep.subr.mxu0 0.0
    %439 = vmatpush1.msra.mxu0 %v412
    %440 = vmatprep.subr.mxu0 0.0
    %441 = vmatpush1.msra.mxu0 %v413
    %442 = vmatprep.subr.mxu0 0.0
    %443 = vmatpush1.msra.mxu0 %v414
    %444 = vmatprep.subr.mxu0 0.0
    %445 = vmatpush1.msra.mxu0 %v415
    %446 = vmatprep.subr.mxu0 0.0
    %447 = vmatpush1.msra.mxu0 %v416
    %448 = vmatprep.subr.mxu0 0.0
    %449 = vmatpush1.msra.mxu0 %v417
    %450 = vmatprep.subr.mxu0 0.0
    %451 = vmatpush1.msra.mxu0 %v418
    %452 = vmatprep.subr.mxu0 0.0
    %453 = vmatpush1.msra.mxu0 %v419
    %454 = vmatprep.subr.mxu0 0.0
    %455 = vmatpush1.msra.mxu0 %v420
    %456 = vmatprep.subr.mxu0 0.0
    %457 = vmatpush1.msra.mxu0 %v421
    %458 = vmatprep.subr.mxu0 0.0
    %459 = vmatpush1.msra.mxu0 %v422
    %460 = vmatprep.subr.mxu0 0.0
    %461 = vmatpush1.msra.mxu0 0.0
    %462 = vmatprep.subr.mxu0 0.0
    %463 = vmatpush1.msra.mxu0 0.0
    %464 = vmatprep.subr.mxu0 0.0
    %465 = vmatpush1.msra.mxu0 0.0
    %466 = vmatprep.subr.mxu0 0.0
    %467 = vmatpush1.msra.mxu0 0.0
    %468 = vmatprep.subr.mxu0 0.0
    %469 = vmatpush1.msra.mxu0 0.0
    %470 = vmatprep.subr.mxu0 0.0
    %471 = vmatpush1.msra.mxu0 0.0
    %472 = vmatprep.subr.mxu0 0.0
    %473 = vmatpush1.msra.mxu0 0.0
    %474 = vmatprep.subr.mxu0 0.0
    %475 = vmatpush1.msra.mxu0 0.0
    %476 = vmatprep.subr.mxu0 0.0
    %477 = vmatpush1.msra.mxu0 0.0
    %478 = vmatprep.subr.mxu0 0.0
    %479 = vmatpush1.msra.mxu0 0.0
    %480 = vmatprep.subr.mxu0 0.0
    %481 = vmatpush1.msra.mxu0 0.0
    %482 = vmatprep.subr.mxu0 0.0
    %483 = vmatpush1.msra.mxu0 0.0
    %484 = vmatprep.subr.mxu0 0.0
    %485 = vmatpush1.msra.mxu0 0.0
    %486 = vmatprep.subr.mxu0 0.0
    %487 = vmatpush1.msra.mxu0 0.0
    %488 = vmatprep.subr.mxu0 0.0
    %489 = vmatpush1.msra.mxu0 0.0
    %490 = vmatprep.subr.mxu0 0.0
    %491 = vmatpush1.msra.mxu0 0.0
    %492 = vmatprep.mubr.f32.mxu0 0.0
    %493 = vmatmul.mubr.f32.gmra.mrb[0].mxu0 %v406
    %v494 = vpop.f32.mrb[0].mxu0
    %v495 = vadd.f32 %v427, %v494
    %v496 = vpop.f32.mrb[0].mxu0
    %497 = vdwg.mxu0
    %498 = vst [vmem:[#allocation7] sm:$0xff] %v495
    // Predicated region
    $region18: #{tpu_custom_call.1} parent=1 // pred_check
      _
    $region19: #{tpu_custom_call.1} parent=1 // pred_check_branch
      %500 = sbr.rel (0) target = $region21
    $region20: #{tpu_custom_call.1} parent=1 // pred_region
      %s502 = ssub.s32 128, 128
      %503 = vsyncadd [#allocation4], %s502
      %s505 = sshll.u32 [#allocation7], 4
      %s506 = int_to_ptr.vmem [resolvable:$true] %s505
      %508 = dma.vmem_to_hbm [thread:$0]  %s506, 128, %s2, [#allocation4]
    $region21: #{tpu_custom_call.1} parent=1 // pred_fallthru
      _
    // Predicated region
    $region22: #{tpu_custom_call.1} parent=1 // pred_check
      _
    $region23: #{tpu_custom_call.1} parent=1 // pred_check_branch
      %510 = sbr.rel (0) target = $region25
    $region24: #{tpu_custom_call.1} parent=1 // pred_region
      %511 = dma.done [#allocation4], 128
    $region25: #{tpu_custom_call.1} parent=1 // pred_fallthru
      _
    %512 = vsyncpa [#allocation3], 1
    %513 = vsyncpa [#allocation6], 1
    %514 = vsyncpa [#allocation4], 1

</llo_original>
